<compile_context>
chip_gen: v7x
topology: tpu7x:2x2x1
jax: 0.10.0
libtpu: 0.0.40
codegen_flags: <defaults>
</compile_context>

<pallas_src>
import jax
import jax.numpy as jnp
from jax.experimental import pallas as pl
from jax.experimental.pallas import tpu as pltpu

_LANE = 128
_SUBLANE = 8
_TILE_BYTES_CAP = 4 * 1024 * 1024      # ~4 MiB per tile per buffer
_VMEM_LIMIT_BYTES = 48 * 1024 * 1024   # in+out double-buffered (16 MiB) + temps, v7x-safe
_SPLIT_MIN_BYTES = 1 * 1024 * 1024     # below this, a single block is fine (overhead-bound)


def _starrelu_kernel(scale_ref, bias_ref, x_ref, o_ref):
    # scale_ref / bias_ref are (1,) f32 scalar-prefetch refs in SMEM.
    x = x_ref[...]
    # bf16 computes natively on v6e/v7x VPUs (harmlessly widened on v5e);
    # everything else computes in f32.
    compute_dtype = jnp.bfloat16 if x.dtype == jnp.bfloat16 else jnp.float32
    s = scale_ref[0].astype(compute_dtype)
    b = bias_ref[0].astype(compute_dtype)
    xc = x.astype(compute_dtype)
    r = jnp.clip(xc, 0.0, 6.0)                     # ReLU6 (matches nn.ReLU6)
    o_ref[...] = (s * (r * r) + b).astype(o_ref.dtype)


def _choose_width(n):
    """Largest lane-width (multiple of 128) that divides n; else pad to 1024."""
    for w in (4096, 2048, 1024, 512, 256, _LANE):
        if n % w == 0:
            return w, False
    return 1024, True


def _choose_block_rows(rows, width, itemsize):
    """Pick a block row count: <= ~4 MiB/tile, multiple of the packed sublane
    count, and (for tensors > 1 MiB) yielding an even number of grid steps so
    v7x's two TensorCores split the work evenly."""
    sub = max(_SUBLANE, 32 // itemsize)   # 8 (32-bit), 16 (16-bit), 32 (8-bit)
    max_block_rows = max(sub, (_TILE_BYTES_CAP // (width * itemsize)) // sub * sub)
    total_bytes = rows * width * itemsize
    if total_bytes <= _SPLIT_MIN_BYTES and rows <= max_block_rows:
        return rows                      # single block == full extent (always legal)
    nblocks = max(2, pl.cdiv(rows, max_block_rows))
    if nblocks % 2:
        nblocks += 1                     # even block count → balanced megacore split
    block_rows = ((pl.cdiv(rows, nblocks) + sub - 1) // sub) * sub
    return min(max_block_rows, block_rows)


def star_relu(x, scale, bias):
    """Apply StarReLU (ReLU6 flavour) elementwise.

    x: any shape / dtype. scale, bias: shape (1,) parameters.
    """
    orig_shape = x.shape
    orig_dtype = x.dtype
    n = x.size
    itemsize = jnp.dtype(orig_dtype).itemsize

    width, needs_pad = _choose_width(n)
    if needs_pad:
        # TODO(synk): handle the ragged tail in-kernel with a masked store so the
        # pad + slice-back HBM passes disappear; typical activation sizes are
        # multiples of 128 so this path is rarely taken.
        n_pad = ((n + width - 1) // width) * width
        x_flat = jnp.pad(jnp.reshape(x, (-1,)), (0, n_pad - n))
    else:
        n_pad = n
        x_flat = jnp.reshape(x, (-1,))
    rows = n_pad // width
    x2d = jnp.reshape(x_flat, (rows, width))

    block_rows = _choose_block_rows(rows, width, itemsize)
    grid = (pl.cdiv(rows, block_rows),)

    cost = pl.CostEstimate(
        flops=4 * n_pad,
        transcendentals=0,
        bytes_accessed=2 * n_pad * itemsize,
    )

    out2d = pl.pallas_call(
        _starrelu_kernel,
        out_shape=jax.ShapeDtypeStruct((rows, width), orig_dtype),
        grid_spec=pltpu.PrefetchScalarGridSpec(
            num_scalar_prefetch=2,   # scale, bias → SMEM once, before the grid runs
            grid=grid,
            in_specs=[
                pl.BlockSpec((block_rows, width), lambda i, s, b: (i, 0)),
            ],
            out_specs=pl.BlockSpec((block_rows, width), lambda i, s, b: (i, 0)),
        ),
        compiler_params=pltpu.CompilerParams(
            dimension_semantics=("parallel",),
            vmem_limit_bytes=_VMEM_LIMIT_BYTES,
        ),
        cost_estimate=cost,
    )(scale.astype(jnp.float32), bias.astype(jnp.float32), x2d)

    if needs_pad:
        out = jnp.reshape(out2d, (-1,))[:n]
        return jnp.reshape(out, orig_shape)
    return jnp.reshape(out2d, orig_shape)


if __name__ == "__main__":
    # Deterministic parameter init matching StarReLU.__init__ defaults:
    #   scale = scale_value * ones(1) = 1.0, bias = bias_value * ones(1) = 0.0
    scale_value = 1.0
    bias_value = 0.0
    scale = scale_value * jnp.ones((1,), dtype=jnp.float32)
    bias = bias_value * jnp.ones((1,), dtype=jnp.float32)

    key = jax.random.PRNGKey(0)
    k_f32, k_bf16 = jax.random.split(key)

    # f32 NCHW feature map (like a PyTorch conv activation).
    x = jax.random.normal(k_f32, (2, 4, 16, 16), dtype=jnp.float32) * 4.0
    out = jax.block_until_ready(star_relu(x, scale, bias))
    ref = scale[0] * jnp.clip(x, 0.0, 6.0) ** 2 + bias[0]
    assert out.shape == x.shape
    assert out.dtype == x.dtype
    assert jnp.allclose(out, ref, atol=1e-5, rtol=1e-5)

    # bf16 path (native bf16 compute on v6e/v7x).
    x_bf16 = (jax.random.normal(k_bf16, (2, 4, 16, 16), dtype=jnp.float32) * 4.0
              ).astype(jnp.bfloat16)
    out_bf16 = jax.block_until_ready(star_relu(x_bf16, scale, bias))
    ref_bf16 = (scale[0] * jnp.clip(x_bf16.astype(jnp.float32), 0.0, 6.0) ** 2
                + bias[0])
    assert out_bf16.shape == x_bf16.shape
    assert out_bf16.dtype == x_bf16.dtype
    assert jnp.allclose(out_bf16.astype(jnp.float32), ref_bf16, atol=0.5, rtol=5e-2)

    print("KERNEL_OK")
</pallas_src>

<mosaic_0001>
module attributes {stable_mosaic.version = 11 : i64} {
  func.func @_starrelu_kernel(%arg0: i32, %arg1: memref<1xf32, #tpu.memory_space<smem>>, %arg2: memref<1xf32, #tpu.memory_space<smem>>, %arg3: memref<1x2048xf32, #tpu.memory_space<vmem>>, %arg4: memref<1x2048xf32, #tpu.memory_space<vmem>>) attributes {dimension_semantics = [#tpu.dimension_semantics<parallel>], iteration_bounds = array<i64: 1>, scalar_prefetch = 2 : i64, scratch_operands = 0 : i64, tpu.core_type = #tpu.core_type<tc>, window_params = [{transform_indices = @transform_0, window_bounds = array<i64: 1, 2048>}, {transform_indices = @transform_1, window_bounds = array<i64: 1, 2048>}]} {
    %c0 = arith.constant 0 : index
    %c0_0 = arith.constant 0 : index
    %0 = vector.load %arg3[%c0, %c0_0] : memref<1x2048xf32, #tpu.memory_space<vmem>>, vector<1x2048xf32>
    %c0_1 = arith.constant 0 : index
    %1 = memref.load %arg1[%c0_1] : memref<1xf32, #tpu.memory_space<smem>>
    %c0_2 = arith.constant 0 : index
    %2 = memref.load %arg2[%c0_2] : memref<1xf32, #tpu.memory_space<smem>>
    %cst = arith.constant 0.000000e+00 : f32
    %cst_3 = arith.constant 6.000000e+00 : f32
    %3 = vector.broadcast %cst : f32 to vector<1x2048xf32>
    %4 = arith.maximumf %3, %0 : vector<1x2048xf32>
    %5 = vector.broadcast %cst_3 : f32 to vector<1x2048xf32>
    %6 = arith.minimumf %5, %4 : vector<1x2048xf32>
    %7 = arith.mulf %6, %6 : vector<1x2048xf32>
    %8 = vector.broadcast %1 : f32 to vector<1x2048xf32>
    %9 = arith.mulf %8, %7 : vector<1x2048xf32>
    %10 = vector.broadcast %2 : f32 to vector<1x2048xf32>
    %11 = arith.addf %9, %10 : vector<1x2048xf32>
    %c0_4 = arith.constant 0 : index
    %c0_5 = arith.constant 0 : index
    %12 = vector.load %arg4[%c0_4, %c0_5] : memref<1x2048xf32, #tpu.memory_space<vmem>>, vector<1x2048xf32>
    tpu.vector_store %arg4[%c0_4, %c0_5], %11 {strides = array<i32>} : memref<1x2048xf32, #tpu.memory_space<vmem>>, vector<1x2048xf32>,
    return
  }
  func.func @transform_0(%arg0: i32, %arg1: memref<1xf32, #tpu.memory_space<smem>>, %arg2: memref<1xf32, #tpu.memory_space<smem>>) -> (i32, i32) {
    %c0_i32 = arith.constant 0 : i32
    %c0_i32_0 = arith.constant 0 : i32
    return %arg0, %c0_i32 : i32, i32
  }
  func.func @transform_1(%arg0: i32, %arg1: memref<1xf32, #tpu.memory_space<smem>>, %arg2: memref<1xf32, #tpu.memory_space<smem>>) -> (i32, i32) {
    %c0_i32 = arith.constant 0 : i32
    %c0_i32_0 = arith.constant 0 : i32
    return %arg0, %c0_i32 : i32, i32
  }
}

</mosaic_0001>

<llo_original>
// kernel: tpu_custom_call.1
$region0: #{tpu_custom_call.1}
  #allocation0 [shape = 'u32[]', space=smem, size = 0x4, offset = 0x4, fixed_abs, tag = 'smem constant byte address 0x4 - core index']
  #allocation1 [shape = 'u32[144,128]{1,0:T(1,128)}', space=vmem, size = 0x12000, scoped, tag = 'internal scratch']
  #allocation2 [shape = 's32[1]{0}', space=sflag, size = 0x4, scoped, tag = 'scoped memory for tpu_custom_call.1']
  #allocation3 [shape = 'f32[1]{0:T(128)S(6)}', space=smem, size = 0x200, scoped, tag = 'prefetched SMEM operand 0']
  #allocation4 [shape = 'f32[1]{0:T(128)S(6)}', space=smem, size = 0x200, scoped, tag = 'prefetched SMEM operand 1']
  %s0 = inlined_call_operand.<no memory space> [shape: f32[1], index: 0, kind: input, shape index: {}]
  %s1 = inlined_call_operand.<no memory space> [shape: f32[1], index: 1, kind: input, shape index: {}]
  %s2 = inlined_call_operand.hbm [shape: f32[1,2048], index: 2, kind: input, shape index: {}]
  %s3 = inlined_call_operand.hbm [shape: f32[1,2048], index: 3, kind: output, shape index: {}]
  %s4 = sld [smem:[#allocation0]]
  $region18: #{tpu_custom_call.1} parent=0
    _
  %s6 = ssub.s32 1, %s4
  %s7 = scalar_select 0, %s6, %s4
  %8 = sst [smem:[#allocation3]] %s0
  %9 = sst [smem:[#allocation4]] %s1
  $region1: #{tpu_custom_call.1} parent=0
    #allocation5 [shape = 'u8[8192]{0}', space=vmem, size = 0x2000, scoped, tag = 'input window, operand 2, single buffered']
    #allocation6 [shape = 's32[1]{0}', space=sflag, size = 0x4, scoped, tag = 'scoped memory for tpu_custom_call.1']
    #allocation7 [shape = 's32[1]{0}', space=sflag, size = 0x4, scoped, tag = 'scoped memory for tpu_custom_call.1']
    #allocation8 [shape = 'u8[8192]{0}', space=vmem, size = 0x2000, scoped, tag = 'output window, operand 0, single buffered']
    %10 = vsyncpa [#allocation6], 0
    %11 = vsyncpa [#allocation7], 0
    // Predicated region
    $region2: #{tpu_custom_call.1} parent=1 // pred_check
      _
    $region3: #{tpu_custom_call.1} parent=1 // pred_check_branch
      %13 = sbr.rel (0) target = $region5
    $region4: #{tpu_custom_call.1} parent=1 // pred_region
      %s15 = ssub.s32 256, 256
      %16 = vsyncadd [#allocation6], %s15
      %s18 = sshll.u32 [#allocation5], 4
      %s19 = int_to_ptr.vmem [resolvable:$true] %s18
      %21 = dma.hbm_to_vmem [thread:$0]  %s2, 256, %s19, [#allocation6]
    $region5: #{tpu_custom_call.1} parent=1 // pred_fallthru
      _
    // Predicated region
    $region6: #{tpu_custom_call.1} parent=1 // pred_check
      _
    $region7: #{tpu_custom_call.1} parent=1 // pred_check_branch
      %23 = sbr.rel (0) target = $region9
    $region8: #{tpu_custom_call.1} parent=1 // pred_region
      %24 = dma.done [#allocation6], 256
    $region9: #{tpu_custom_call.1} parent=1 // pred_fallthru
      _
    %v25 = vld [vmem:[#allocation5] sm:$0xff]
    %v26 = vld [vmem:[#allocation5 + $0x8] sm:$0xff]
    %s27 = sld [smem:[#allocation3]]
    %s28 = sld [smem:[#allocation4]]
    %v29 = vmax.f32 %v25, 0.0
    %v30 = vmax.f32 %v26, 0.0
    %v31 = vmin.f32 %v29, 6.0
    %v32 = vmin.f32 %v30, 6.0
    %v33 = vmul.f32 %v31, %v31
    %v34 = vmul.f32 %v32, %v32
    %v35 = vstv %s27
    %v36 = vmul.f32 %v35, %v33
    %v37 = vmul.f32 %v35, %v34
    %v38 = vstv %s28
    %v39 = vadd.f32 %v36, %v38
    %v40 = vadd.f32 %v37, %v38
    %41 = vst [vmem:[#allocation8] sm:$0xff] %v39
    %42 = vst [vmem:[#allocation8 + $0x8] sm:$0xff] %v40
    // Predicated region
    $region10: #{tpu_custom_call.1} parent=1 // pred_check
      _
    $region11: #{tpu_custom_call.1} parent=1 // pred_check_branch
      %44 = sbr.rel (0) target = $region13
    $region12: #{tpu_custom_call.1} parent=1 // pred_region
      %s46 = ssub.s32 256, 256
      %47 = vsyncadd [#allocation7], %s46
      %s49 = sshll.u32 [#allocation8], 4
      %s50 = int_to_ptr.vmem [resolvable:$true] %s49
      %52 = dma.vmem_to_hbm [thread:$0]  %s50, 256, %s3, [#allocation7]
    $region13: #{tpu_custom_call.1} parent=1 // pred_fallthru
      _
    // Predicated region
    $region14: #{tpu_custom_call.1} parent=1 // pred_check
      _
    $region15: #{tpu_custom_call.1} parent=1 // pred_check_branch
      %54 = sbr.rel (0) target = $region17
    $region16: #{tpu_custom_call.1} parent=1 // pred_region
      %55 = dma.done [#allocation7], 256
    $region17: #{tpu_custom_call.1} parent=1 // pred_fallthru
      _
    %56 = vsyncpa [#allocation6], 1
    %57 = vsyncpa [#allocation7], 1

</llo_original>
